<compile_context>
chip_gen: v7x
topology: tpu7x:2x2x1
jax: 0.10.0
libtpu: 0.0.40
codegen_flags: <defaults>
</compile_context>

<pallas_src>
import jax
import jax.numpy as jnp
from jax.experimental import pallas as pl
from jax.experimental.pallas import tpu as pltpu


def _round_up(x, m):
    return ((x + m - 1) // m) * m


def _chip_caps():
    """Best-effort trace-time chip query; falls back to v5e/v6e-like defaults."""
    vmem_bytes = 128 * 2 ** 20
    try:
        info = pltpu.get_tpu_info()
        vmem_bytes = int(info.vmem_capacity_bytes)
    except Exception:
        pass
    # v7x exposes 64 MiB VMEM per TensorCore and has 2 TCs/chip;
    # v5e/v6e expose 128 MiB and have a single TC.
    is_v7x_like = vmem_bytes <= 64 * 2 ** 20
    n_tc = 2 if is_v7x_like else 1
    vmem_cap = (48 * 2 ** 20) if is_v7x_like else (96 * 2 ** 20)
    return n_tc, vmem_cap


def _make_edge_mlp_kernel(num_linear_layers, compute_dtype):
    """Kernel body for the edge MLP.

    Ref order (positional):
      edge_attr, src, dest,                       # (tile_p, Dp) lane-packed f32 tiles
      w1_e, w1_s, w1_d, b1,                       # first Linear, weight split 3-ways
      [w_k, b_k for k in 2..num_linear_layers],   # remaining Linear layers
      out
    """

    def kernel(*refs):
        ea_ref, src_ref, dst_ref = refs[0], refs[1], refs[2]
        w1e_ref, w1s_ref, w1d_ref, b1_ref = refs[3], refs[4], refs[5], refs[6]
        rest = refs[7:-1]
        o_ref = refs[-1]

        # Cast the f32 tiles to bf16 in VMEM (cheap VPU op, hidden under DMA) so
        # the MXU sees bf16 operands with f32 accumulation.
        ea = ea_ref[...].astype(compute_dtype)
        sr = src_ref[...].astype(compute_dtype)
        de = dst_ref[...].astype(compute_dtype)

        # First Linear over the (implicit) concat [edge_attr, src, dest]:
        # three partial matmuls (each a full K = Dp MXU pass) summed in f32.
        x = (
            jnp.dot(ea, w1e_ref[...], preferred_element_type=jnp.float32)
            + jnp.dot(sr, w1s_ref[...], preferred_element_type=jnp.float32)
            + jnp.dot(de, w1d_ref[...], preferred_element_type=jnp.float32)
            + b1_ref[...]
        )
        # SiLU after every Linear except the last (f32: EUP sigmoid + VPU mul).
        if num_linear_layers > 1:
            x = x * jax.nn.sigmoid(x)

        n_rest = len(rest) // 2
        for li in range(n_rest):
            w = rest[2 * li][...]
            b = rest[2 * li + 1][...]
            x = jnp.dot(x.astype(compute_dtype), w,
                        preferred_element_type=jnp.float32) + b
            if li != n_rest - 1:
                x = x * jax.nn.sigmoid(x)

        o_ref[...] = x.astype(o_ref.dtype)

    return kernel


def edge_model_forward(src, dest, edge_attr, params, *,
                       tile_e=8192, compute_dtype=jnp.bfloat16, out_dtype=None):
    """Pallas implementation of EdgeModel.forward.

    src, dest, edge_attr : (E, D) float32
    params : dict with
      'w1' : (3*D, D)   first Linear weight, stored (in, out) = torch W.T
      'b1' : (D,)
      'ws' : list of (D, D) for remaining Linear layers (in, out)
      'bs' : list of (D,)
    """
    E, D = src.shape
    out_dtype = src.dtype if out_dtype is None else out_dtype

    if E == 0:  # grid=0 is not a valid pallas_call; nothing to compute.
        return jnp.zeros((0, D), out_dtype)

    # ---- lane packing: view (E, D) as (E/P, P*D), P = 128 // D --------------
    # When 128 % D != 0 this falls back to P = 1 (correct but lane-sparse).
    P = 128 // D if (D <= 128 and 128 % D == 0) else 1
    Dp = P * D

    # E must be a multiple of P for the free row-major reinterpretation.
    # When ragged, pad by at most P-1 rows (the only case that copies inputs).
    E_p = _round_up(E, P)

    def pack_edges(a):
        if E_p != E:
            a = jnp.pad(a, ((0, E_p - E), (0, 0)))
        return a.reshape(E_p // P, Dp)      # pure row-major reinterpretation, f32

    ea = pack_edges(edge_attr)
    sr = pack_edges(src)
    de = pack_edges(dest)
    n_rows = E_p // P

    # ---- parameter packing (tiny: (Dp, Dp) per layer) ------------------------
    def packed_w(w):                        # (D, D) -> (Dp, Dp) block diagonal
        if P > 1:
            w = jnp.kron(jnp.eye(P, dtype=w.dtype), w)
        return w.astype(compute_dtype)

    def packed_b(b):                        # (D,) -> (1, Dp), kept in f32
        return jnp.tile(b, P).reshape(1, Dp).astype(jnp.float32)

    w1 = params["w1"]                       # (3D, D)
    weight_ops = [
        packed_w(w1[0 * D:1 * D]),          # block multiplying edge_attr
        packed_w(w1[1 * D:2 * D]),          # block multiplying src
        packed_w(w1[2 * D:3 * D]),          # block multiplying dest
        packed_b(params["b1"]),
    ]
    for w, b in zip(params["ws"], params["bs"]):
        weight_ops += [packed_w(w), packed_b(b)]
    num_linear = 1 + len(params["ws"])

    # ---- chip-aware tiling ----------------------------------------------------
    n_tc, vmem_cap = _chip_caps()
    cbytes = jnp.dtype(compute_dtype).itemsize
    obytes = jnp.dtype(out_dtype).itemsize

    def vmem_est(tp):
        return (
            3 * 2 * tp * Dp * 4                     # 3 f32 edge inputs, double-buffered
            + 2 * tp * Dp * obytes                  # output, double-buffered
            + 2 * (num_linear + 2) * Dp * Dp * cbytes  # weights (first layer split 3-way)
            + 2 * num_linear * Dp * 4               # biases
            + 6 * tp * Dp * 4                       # f32/bf16 intermediates headroom
        )

    tile_p = max(8, (max(tile_e, 1) // P) // 8 * 8)     # packed rows per step, mult of 8
    if n_tc >= 2 and n_rows >= 2 * n_tc * 8:
        # v7x: keep >= 2 grid steps per TensorCore so input DMA stays double-buffered.
        tile_p = min(tile_p, max(8, _round_up(pl.cdiv(n_rows, 2 * n_tc), 8)))
    # Shrink the tile if the double-buffered working set would blow the VMEM budget.
    while tile_p > 8 and vmem_est(tile_p) > int(0.8 * vmem_cap):
        tile_p = max(8, (tile_p // 2) // 8 * 8)
    if tile_p >= n_rows:
        tile_p = n_rows                     # single full-extent block, no tail masking
    grid = pl.cdiv(n_rows, tile_p)          # partial last block padded/masked by Pallas

    vmem_limit = int(min(vmem_cap, max(32 * 2 ** 20, 2 * vmem_est(tile_p))))

    edge_spec = pl.BlockSpec((tile_p, Dp), lambda i: (i, 0))
    w_spec = pl.BlockSpec((Dp, Dp), lambda i: (0, 0))
    b_spec = pl.BlockSpec((1, Dp), lambda i: (0, 0))
    # NOTE: weights/biases are grid-invariant (constant index_map) so they are not
    # re-fetched per step; pipeline_mode=pl.Buffered(1) could also single-buffer
    # them, but at Dp=128 the VMEM saving is negligible.
    in_specs = [edge_spec, edge_spec, edge_spec, w_spec, w_spec, w_spec, b_spec]
    for _ in params["ws"]:
        in_specs += [w_spec, b_spec]

    kernel = _make_edge_mlp_kernel(num_linear, compute_dtype)

    out_packed = pl.pallas_call(
        kernel,
        out_shape=jax.ShapeDtypeStruct((n_rows, Dp), out_dtype),
        grid_spec=pltpu.PrefetchScalarGridSpec(
            num_scalar_prefetch=0,
            grid=(grid,),
            in_specs=in_specs,
            out_specs=pl.BlockSpec((tile_p, Dp), lambda i: (i, 0)),
        ),
        compiler_params=pltpu.CompilerParams(
            dimension_semantics=("parallel",),
            vmem_limit_bytes=vmem_limit,
        ),
    )(ea, sr, de, *weight_ops)

    # Undo the lane packing (free reinterpretation). The [:E] slice only exists
    # (and only copies) in the rare E % P != 0 case.
    out = out_packed.reshape(E_p, D)
    return out if E_p == E else out[:E]


def init_edge_model_params(key, n_hidden, dim_hidden):
    """Deterministic synthetic parameters matching EdgeModel(n_hidden, dim_hidden)."""
    D = dim_hidden
    layer_vec = [3 * D] + n_hidden * [D] + [D]
    ws, bs = [], []
    for k in range(len(layer_vec) - 1):
        key, kw, kb = jax.random.split(key, 3)
        fan_in, fan_out = layer_vec[k], layer_vec[k + 1]
        # weight stored as (in, out)  ==  torch weight (out, in) transposed
        w = jax.random.normal(kw, (fan_in, fan_out), jnp.float32) * (1.0 / jnp.sqrt(fan_in))
        b = jax.random.normal(kb, (fan_out,), jnp.float32) * 0.01
        ws.append(w)
        bs.append(b)
    return {"w1": ws[0], "b1": bs[0], "ws": ws[1:], "bs": bs[1:]}


def edge_model_reference(src, dest, edge_attr, params, compute_dtype=None):
    """Plain-JAX reference matching the PyTorch forward semantics.

    compute_dtype=None  -> full f32 reference.
    compute_dtype=bf16  -> same reduced-precision matmuls as the kernel
                           (f32 accumulation), for a tight numerical check.
    """
    x = jnp.concatenate([edge_attr, src, dest], axis=1)
    all_ws = [params["w1"]] + list(params["ws"])
    all_bs = [params["b1"]] + list(params["bs"])
    n = len(all_ws)
    for i, (w, b) in enumerate(zip(all_ws, all_bs)):
        if compute_dtype is not None:
            x = jnp.dot(x.astype(compute_dtype), w.astype(compute_dtype),
                        preferred_element_type=jnp.float32) + b
        else:
            x = x @ w + b
        if i != n - 1:
            x = x * jax.nn.sigmoid(x)  # SiLU
    return x


if __name__ == "__main__":
    n_hidden = 2
    dim_hidden = 32
    E = 200  # deliberately ragged vs. the tile size: exercises partial-block handling

    key = jax.random.PRNGKey(0)
    key, k_src, k_dst, k_ea, k_params = jax.random.split(key, 5)
    src = jax.random.normal(k_src, (E, dim_hidden), jnp.float32)
    dest = jax.random.normal(k_dst, (E, dim_hidden), jnp.float32)
    edge_attr = jax.random.normal(k_ea, (E, dim_hidden), jnp.float32)

    params = init_edge_model_params(k_params, n_hidden, dim_hidden)

    out = edge_model_forward(src, dest, edge_attr, params)
    out = jax.block_until_ready(out)
    assert out.shape == (E, dim_hidden)

    # Tight check against a reference using the same bf16-matmul / f32-accum numerics.
    ref_bf16 = edge_model_reference(src, dest, edge_attr, params,
                                    compute_dtype=jnp.bfloat16)
    assert jnp.allclose(out, ref_bf16, atol=1.5e-2, rtol=1e-2)

    # Sanity check against the full-f32 reference (bf16 rounding tolerance).
    ref_f32 = edge_model_reference(src, dest, edge_attr, params)
    assert jnp.allclose(out, ref_f32, atol=1e-1, rtol=1e-1)

    print("KERNEL_OK")
</pallas_src>

<mosaic_0001>
module attributes {stable_mosaic.version = 11 : i64} {
  func.func @kernel(%arg0: i32, %arg1: memref<50x128xf32, #tpu.memory_space<vmem>>, %arg2: memref<50x128xf32, #tpu.memory_space<vmem>>, %arg3: memref<50x128xf32, #tpu.memory_space<vmem>>, %arg4: memref<128x128xbf16, #tpu.memory_space<vmem>>, %arg5: memref<128x128xbf16, #tpu.memory_space<vmem>>, %arg6: memref<128x128xbf16, #tpu.memory_space<vmem>>, %arg7: memref<1x128xf32, #tpu.memory_space<vmem>>, %arg8: memref<128x128xbf16, #tpu.memory_space<vmem>>, %arg9: memref<1x128xf32, #tpu.memory_space<vmem>>, %arg10: memref<128x128xbf16, #tpu.memory_space<vmem>>, %arg11: memref<1x128xf32, #tpu.memory_space<vmem>>, %arg12: memref<50x128xf32, #tpu.memory_space<vmem>>) attributes {dimension_semantics = [#tpu.dimension_semantics<parallel>], iteration_bounds = array<i64: 1>, scalar_prefetch = 0 : i64, scratch_operands = 0 : i64, tpu.core_type = #tpu.core_type<tc>, window_params = [{transform_indices = @transform_0, window_bounds = array<i64: 50, 128>}, {transform_indices = @transform_1, window_bounds = array<i64: 50, 128>}, {transform_indices = @transform_2, window_bounds = array<i64: 50, 128>}, {pipeline_mode = #tpu.pipeline_mode<synchronous>, transform_indices = @transform_3, window_bounds = array<i64: 128, 128>}, {pipeline_mode = #tpu.pipeline_mode<synchronous>, transform_indices = @transform_4, window_bounds = array<i64: 128, 128>}, {pipeline_mode = #tpu.pipeline_mode<synchronous>, transform_indices = @transform_5, window_bounds = array<i64: 128, 128>}, {pipeline_mode = #tpu.pipeline_mode<synchronous>, transform_indices = @transform_6, window_bounds = array<i64: 1, 128>}, {pipeline_mode = #tpu.pipeline_mode<synchronous>, transform_indices = @transform_7, window_bounds = array<i64: 128, 128>}, {pipeline_mode = #tpu.pipeline_mode<synchronous>, transform_indices = @transform_8, window_bounds = array<i64: 1, 128>}, {pipeline_mode = #tpu.pipeline_mode<synchronous>, transform_indices = @transform_9, window_bounds = array<i64: 128, 128>}, {pipeline_mode = #tpu.pipeline_mode<synchronous>, transform_indices = @transform_10, window_bounds = array<i64: 1, 128>}, {transform_indices = @transform_11, window_bounds = array<i64: 50, 128>}]} {
    %c0 = arith.constant 0 : index
    %c0_0 = arith.constant 0 : index
    %0 = vector.load %arg1[%c0, %c0_0] : memref<50x128xf32, #tpu.memory_space<vmem>>, vector<50x128xf32>
    %1 = arith.truncf %0 : vector<50x128xf32> to vector<50x128xbf16>
    %c0_1 = arith.constant 0 : index
    %c0_2 = arith.constant 0 : index
    %2 = vector.load %arg2[%c0_1, %c0_2] : memref<50x128xf32, #tpu.memory_space<vmem>>, vector<50x128xf32>
    %3 = arith.truncf %2 : vector<50x128xf32> to vector<50x128xbf16>
    %c0_3 = arith.constant 0 : index
    %c0_4 = arith.constant 0 : index
    %4 = vector.load %arg3[%c0_3, %c0_4] : memref<50x128xf32, #tpu.memory_space<vmem>>, vector<50x128xf32>
    %5 = arith.truncf %4 : vector<50x128xf32> to vector<50x128xbf16>
    %c0_5 = arith.constant 0 : index
    %c0_6 = arith.constant 0 : index
    %6 = vector.load %arg4[%c0_5, %c0_6] : memref<128x128xbf16, #tpu.memory_space<vmem>>, vector<128x128xbf16>
    %cst = arith.constant dense<0.000000e+00> : vector<50x128xf32>
    %7 = tpu.matmul %1, %6, %cst {dimension_numbers = #tpu.dot_dimension_numbers<[1], [0], [0], [1], [0, 0, 1, 1], [], []>} : vector<50x128xbf16>, vector<128x128xbf16>, vector<50x128xf32> -> vector<50x128xf32>
    %c0_7 = arith.constant 0 : index
    %c0_8 = arith.constant 0 : index
    %8 = vector.load %arg5[%c0_7, %c0_8] : memref<128x128xbf16, #tpu.memory_space<vmem>>, vector<128x128xbf16>
    %cst_9 = arith.constant dense<0.000000e+00> : vector<50x128xf32>
    %9 = tpu.matmul %3, %8, %cst_9 {dimension_numbers = #tpu.dot_dimension_numbers<[1], [0], [0], [1], [0, 0, 1, 1], [], []>} : vector<50x128xbf16>, vector<128x128xbf16>, vector<50x128xf32> -> vector<50x128xf32>
    %10 = arith.addf %7, %9 : vector<50x128xf32>
    %c0_10 = arith.constant 0 : index
    %c0_11 = arith.constant 0 : index
    %11 = vector.load %arg6[%c0_10, %c0_11] : memref<128x128xbf16, #tpu.memory_space<vmem>>, vector<128x128xbf16>
    %cst_12 = arith.constant dense<0.000000e+00> : vector<50x128xf32>
    %12 = tpu.matmul %5, %11, %cst_12 {dimension_numbers = #tpu.dot_dimension_numbers<[1], [0], [0], [1], [0, 0, 1, 1], [], []>} : vector<50x128xbf16>, vector<128x128xbf16>, vector<50x128xf32> -> vector<50x128xf32>
    %13 = arith.addf %10, %12 : vector<50x128xf32>
    %c0_13 = arith.constant 0 : index
    %c0_14 = arith.constant 0 : index
    %14 = vector.load %arg7[%c0_13, %c0_14] : memref<1x128xf32, #tpu.memory_space<vmem>>, vector<1x128xf32>
    %15 = vector.broadcast %14 : vector<1x128xf32> to vector<50x128xf32>
    %16 = arith.addf %13, %15 : vector<50x128xf32>
    %17 = arith.negf %16 : vector<50x128xf32>
    %18 = math.exp %17 : vector<50x128xf32>
    %cst_15 = arith.constant 1.000000e+00 : f32
    %19 = vector.broadcast %cst_15 : f32 to vector<50x128xf32>
    %20 = arith.addf %19, %18 : vector<50x128xf32>
    %21 = arith.divf %19, %20 : vector<50x128xf32>
    %22 = arith.mulf %16, %21 : vector<50x128xf32>
    %c0_16 = arith.constant 0 : index
    %c0_17 = arith.constant 0 : index
    %23 = vector.load %arg8[%c0_16, %c0_17] : memref<128x128xbf16, #tpu.memory_space<vmem>>, vector<128x128xbf16>
    %c0_18 = arith.constant 0 : index
    %c0_19 = arith.constant 0 : index
    %24 = vector.load %arg9[%c0_18, %c0_19] : memref<1x128xf32, #tpu.memory_space<vmem>>, vector<1x128xf32>
    %25 = arith.truncf %22 : vector<50x128xf32> to vector<50x128xbf16>
    %cst_20 = arith.constant dense<0.000000e+00> : vector<50x128xf32>
    %26 = tpu.matmul %25, %23, %cst_20 {dimension_numbers = #tpu.dot_dimension_numbers<[1], [0], [0], [1], [0, 0, 1, 1], [], []>} : vector<50x128xbf16>, vector<128x128xbf16>, vector<50x128xf32> -> vector<50x128xf32>
    %27 = vector.broadcast %24 : vector<1x128xf32> to vector<50x128xf32>
    %28 = arith.addf %26, %27 : vector<50x128xf32>
    %29 = arith.negf %28 : vector<50x128xf32>
    %30 = math.exp %29 : vector<50x128xf32>
    %cst_21 = arith.constant 1.000000e+00 : f32
    %31 = vector.broadcast %cst_21 : f32 to vector<50x128xf32>
    %32 = arith.addf %31, %30 : vector<50x128xf32>
    %33 = arith.divf %31, %32 : vector<50x128xf32>
    %34 = arith.mulf %28, %33 : vector<50x128xf32>
    %c0_22 = arith.constant 0 : index
    %c0_23 = arith.constant 0 : index
    %35 = vector.load %arg10[%c0_22, %c0_23] : memref<128x128xbf16, #tpu.memory_space<vmem>>, vector<128x128xbf16>
    %c0_24 = arith.constant 0 : index
    %c0_25 = arith.constant 0 : index
    %36 = vector.load %arg11[%c0_24, %c0_25] : memref<1x128xf32, #tpu.memory_space<vmem>>, vector<1x128xf32>
    %37 = arith.truncf %34 : vector<50x128xf32> to vector<50x128xbf16>
    %cst_26 = arith.constant dense<0.000000e+00> : vector<50x128xf32>
    %38 = tpu.matmul %37, %35, %cst_26 {dimension_numbers = #tpu.dot_dimension_numbers<[1], [0], [0], [1], [0, 0, 1, 1], [], []>} : vector<50x128xbf16>, vector<128x128xbf16>, vector<50x128xf32> -> vector<50x128xf32>
    %39 = vector.broadcast %36 : vector<1x128xf32> to vector<50x128xf32>
    %40 = arith.addf %38, %39 : vector<50x128xf32>
    %c0_27 = arith.constant 0 : index
    %c0_28 = arith.constant 0 : index
    %41 = vector.load %arg12[%c0_27, %c0_28] : memref<50x128xf32, #tpu.memory_space<vmem>>, vector<50x128xf32>
    tpu.vector_store %arg12[%c0_27, %c0_28], %40 {strides = array<i32>} : memref<50x128xf32, #tpu.memory_space<vmem>>, vector<50x128xf32>,
    return
  }
  func.func @transform_0(%arg0: i32) -> (i32, i32) {
    %c0_i32 = arith.constant 0 : i32
    %c0_i32_0 = arith.constant 0 : i32
    return %arg0, %c0_i32 : i32, i32
  }
  func.func @transform_1(%arg0: i32) -> (i32, i32) {
    %c0_i32 = arith.constant 0 : i32
    %c0_i32_0 = arith.constant 0 : i32
    return %arg0, %c0_i32 : i32, i32
  }
  func.func @transform_2(%arg0: i32) -> (i32, i32) {
    %c0_i32 = arith.constant 0 : i32
    %c0_i32_0 = arith.constant 0 : i32
    return %arg0, %c0_i32 : i32, i32
  }
  func.func @transform_3(%arg0: i32) -> (i32, i32) {
    %c0_i32 = arith.constant 0 : i32
    %c0_i32_0 = arith.constant 0 : i32
    %c0_i32_1 = arith.constant 0 : i32
    return %c0_i32, %c0_i32_0 : i32, i32
  }
  func.func @transform_4(%arg0: i32) -> (i32, i32) {
    %c0_i32 = arith.constant 0 : i32
    %c0_i32_0 = arith.constant 0 : i32
    %c0_i32_1 = arith.constant 0 : i32
    return %c0_i32, %c0_i32_0 : i32, i32
  }
  func.func @transform_5(%arg0: i32) -> (i32, i32) {
    %c0_i32 = arith.constant 0 : i32
    %c0_i32_0 = arith.constant 0 : i32
    %c0_i32_1 = arith.constant 0 : i32
    return %c0_i32, %c0_i32_0 : i32, i32
  }
  func.func @transform_6(%arg0: i32) -> (i32, i32) {
    %c0_i32 = arith.constant 0 : i32
    %c0_i32_0 = arith.constant 0 : i32
    %c0_i32_1 = arith.constant 0 : i32
    return %c0_i32, %c0_i32_0 : i32, i32
  }
  func.func @transform_7(%arg0: i32) -> (i32, i32) {
    %c0_i32 = arith.constant 0 : i32
    %c0_i32_0 = arith.constant 0 : i32
    %c0_i32_1 = arith.constant 0 : i32
    return %c0_i32, %c0_i32_0 : i32, i32
  }
  func.func @transform_8(%arg0: i32) -> (i32, i32) {
    %c0_i32 = arith.constant 0 : i32
    %c0_i32_0 = arith.constant 0 : i32
    %c0_i32_1 = arith.constant 0 : i32
    return %c0_i32, %c0_i32_0 : i32, i32
  }
  func.func @transform_9(%arg0: i32) -> (i32, i32) {
    %c0_i32 = arith.constant 0 : i32
    %c0_i32_0 = arith.constant 0 : i32
    %c0_i32_1 = arith.constant 0 : i32
    return %c0_i32, %c0_i32_0 : i32, i32
  }
  func.func @transform_10(%arg0: i32) -> (i32, i32) {
    %c0_i32 = arith.constant 0 : i32
    %c0_i32_0 = arith.constant 0 : i32
    %c0_i32_1 = arith.constant 0 : i32
    return %c0_i32, %c0_i32_0 : i32, i32
  }
  func.func @transform_11(%arg0: i32) -> (i32, i32) {
    %c0_i32 = arith.constant 0 : i32
    %c0_i32_0 = arith.constant 0 : i32
    return %arg0, %c0_i32 : i32, i32
  }
}

</mosaic_0001>

<llo_original>
// kernel: tpu_custom_call.1
$region0: #{tpu_custom_call.1}
  #allocation0 [shape = 'u32[]', space=smem, size = 0x4, offset = 0x4, fixed_abs, tag = 'smem constant byte address 0x4 - core index']
  #allocation1 [shape = 'u32[144,128]{1,0:T(1,128)}', space=vmem, size = 0x12000, scoped, tag = 'internal scratch']
  %s0 = inlined_call_operand.hbm [shape: f32[50,128], index: 0, kind: input, shape index: {}]
  %s1 = inlined_call_operand.hbm [shape: f32[50,128], index: 1, kind: input, shape index: {}]
  %s2 = inlined_call_operand.hbm [shape: f32[50,128], index: 2, kind: input, shape index: {}]
  %s3 = inlined_call_operand.hbm [shape: bf16[128,128], index: 3, kind: input, shape index: {}]
  %s4 = inlined_call_operand.hbm [shape: bf16[128,128], index: 4, kind: input, shape index: {}]
  %s5 = inlined_call_operand.hbm [shape: bf16[128,128], index: 5, kind: input, shape index: {}]
  %s6 = inlined_call_operand.vmem [shape: f32[1,128], index: 6, kind: input, shape index: {}]
  %s7 = inlined_call_operand.hbm [shape: bf16[128,128], index: 7, kind: input, shape index: {}]
  %s8 = inlined_call_operand.vmem [shape: f32[1,128], index: 8, kind: input, shape index: {}]
  %s9 = inlined_call_operand.hbm [shape: bf16[128,128], index: 9, kind: input, shape index: {}]
  %s10 = inlined_call_operand.vmem [shape: f32[1,128], index: 10, kind: input, shape index: {}]
  %s11 = inlined_call_operand.hbm [shape: f32[50,128], index: 11, kind: output, shape index: {}]
  %s12 = sld [smem:[#allocation0]]
  $region86: #{tpu_custom_call.1} parent=0
    _
  %s14 = ssub.s32 1, %s12
  %s15 = scalar_select 0, %s14, %s12
  $region1: #{tpu_custom_call.1} parent=0
    #allocation2 [shape = 'u8[28672]{0}', space=vmem, size = 0x7000, scoped, tag = 'input window, operand 0, single buffered']
    #allocation3 [shape = 's32[1]{0}', space=sflag, size = 0x4, scoped, tag = 'scoped memory for tpu_custom_call.1']
    #allocation4 [shape = 's32[1]{0}', space=sflag, size = 0x4, scoped, tag = 'scoped memory for tpu_custom_call.1']
    #allocation5 [shape = 'u8[28672]{0}', space=vmem, size = 0x7000, scoped, tag = 'input window, operand 1, single buffered']
    #allocation6 [shape = 's32[1]{0}', space=sflag, size = 0x4, scoped, tag = 'scoped memory for tpu_custom_call.1']
    #allocation7 [shape = 'u8[28672]{0}', space=vmem, size = 0x7000, scoped, tag = 'input window, operand 2, single buffered']
    #allocation8 [shape = 'u8[32768]{0}', space=vmem, size = 0x8000, scoped, tag = 'input window, operand 3, single buffered']
    #allocation9 [shape = 's32[1]{0}', space=sflag, size = 0x4, scoped, tag = 'scoped memory for tpu_custom_call.1']
    #allocation10 [shape = 'u8[32768]{0}', space=vmem, size = 0x8000, scoped, tag = 'input window, operand 4, single buffered']
    #allocation11 [shape = 'u8[32768]{0}', space=vmem, size = 0x8000, scoped, tag = 'input window, operand 5, single buffered']
    #allocation12 [shape = 's32[1]{0}', space=sflag, size = 0x4, scoped, tag = 'scoped memory for tpu_custom_call.1']
    #allocation13 [shape = 'u8[32768]{0}', space=vmem, size = 0x8000, scoped, tag = 'input window, operand 7, single buffered']
    #allocation14 [shape = 'u8[32768]{0}', space=vmem, size = 0x8000, scoped, tag = 'input window, operand 9, single buffered']
    #allocation15 [shape = 's32[1]{0}', space=sflag, size = 0x4, scoped, tag = 'scoped memory for tpu_custom_call.1']
    #allocation16 [shape = 'u8[28672]{0}', space=vmem, size = 0x7000, scoped, tag = 'output window, operand 0, single buffered']
    %16 = vsyncpa [#allocation3], 0
    %17 = vsyncpa [#allocation6], 0
    %18 = vsyncpa [#allocation9], 0
    %19 = vsyncpa [#allocation12], 0
    %20 = vsyncpa [#allocation15], 0
    %21 = vsyncpa [#allocation4], 0
    // Predicated region
    $region2: #{tpu_custom_call.1} parent=1 // pred_check
      _
    $region3: #{tpu_custom_call.1} parent=1 // pred_check_branch
      %23 = sbr.rel (0) target = $region5
    $region4: #{tpu_custom_call.1} parent=1 // pred_region
      %s25 = ssub.s32 896, 896
      %26 = vsyncadd [#allocation3], %s25
      %s27 = sshll.u32 [#allocation2], 4
      %s28 = int_to_ptr.vmem [resolvable:$true] %s27
      %33 = dma.hbm_to_vmem [thread:$0]  %s0, 896, %s28, [#allocation3], 128, 128, 8
    $region5: #{tpu_custom_call.1} parent=1 // pred_fallthru
      _
    // Predicated region
    $region6: #{tpu_custom_call.1} parent=1 // pred_check
      _
    $region7: #{tpu_custom_call.1} parent=1 // pred_check_branch
      %35 = sbr.rel (0) target = $region9
    $region8: #{tpu_custom_call.1} parent=1 // pred_region
      %s37 = ssub.s32 896, 896
      %38 = vsyncadd [#allocation6], %s37
      %s39 = sshll.u32 [#allocation5], 4
      %s40 = int_to_ptr.vmem [resolvable:$true] %s39
      %45 = dma.hbm_to_vmem [thread:$0]  %s1, 896, %s40, [#allocation6], 128, 128, 8
    $region9: #{tpu_custom_call.1} parent=1 // pred_fallthru
      _
    // Predicated region
    $region10: #{tpu_custom_call.1} parent=1 // pred_check
      _
    $region11: #{tpu_custom_call.1} parent=1 // pred_check_branch
      %47 = sbr.rel (0) target = $region13
    $region12: #{tpu_custom_call.1} parent=1 // pred_region
      %s49 = ssub.s32 896, 896
      %50 = vsyncadd [#allocation6], %s49
      %s51 = sshll.u32 [#allocation7], 4
      %s52 = int_to_ptr.vmem [resolvable:$true] %s51
      %57 = dma.hbm_to_vmem [thread:$0]  %s2, 896, %s52, [#allocation6], 128, 128, 8
    $region13: #{tpu_custom_call.1} parent=1 // pred_fallthru
      _
    // Predicated region
    $region14: #{tpu_custom_call.1} parent=1 // pred_check
      _
    $region15: #{tpu_custom_call.1} parent=1 // pred_check_branch
      %59 = sbr.rel (0) target = $region17
    $region16: #{tpu_custom_call.1} parent=1 // pred_region
      %s61 = ssub.s32 1024, 1024
      %62 = vsyncadd [#allocation9], %s61
      %s63 = sshll.u32 [#allocation8], 4
      %s64 = int_to_ptr.vmem [resolvable:$true] %s63
      %69 = dma.hbm_to_vmem [thread:$0]  %s3, 1024, %s64, [#allocation9], 64, 64, 4
    $region17: #{tpu_custom_call.1} parent=1 // pred_fallthru
      _
    // Predicated region
    $region18: #{tpu_custom_call.1} parent=1 // pred_check
      _
    $region19: #{tpu_custom_call.1} parent=1 // pred_check_branch
      %71 = sbr.rel (0) target = $region21
    $region20: #{tpu_custom_call.1} parent=1 // pred_region
      %s73 = ssub.s32 1024, 1024
      %74 = vsyncadd [#allocation9], %s73
      %s75 = sshll.u32 [#allocation10], 4
      %s76 = int_to_ptr.vmem [resolvable:$true] %s75
      %81 = dma.hbm_to_vmem [thread:$0]  %s4, 1024, %s76, [#allocation9], 64, 64, 4
    $region21: #{tpu_custom_call.1} parent=1 // pred_fallthru
      _
    // Predicated region
    $region22: #{tpu_custom_call.1} parent=1 // pred_check
      _
    $region23: #{tpu_custom_call.1} parent=1 // pred_check_branch
      %83 = sbr.rel (0) target = $region25
    $region24: #{tpu_custom_call.1} parent=1 // pred_region
      %s85 = ssub.s32 1024, 1024
      %86 = vsyncadd [#allocation12], %s85
      %s87 = sshll.u32 [#allocation11], 4
      %s88 = int_to_ptr.vmem [resolvable:$true] %s87
      %93 = dma.hbm_to_vmem [thread:$0]  %s5, 1024, %s88, [#allocation12], 64, 64, 4
    $region25: #{tpu_custom_call.1} parent=1 // pred_fallthru
      _
    // Predicated region
    $region26: #{tpu_custom_call.1} parent=1 // pred_check
      _
    $region27: #{tpu_custom_call.1} parent=1 // pred_check_branch
      %95 = sbr.rel (0) target = $region29
    $region28: #{tpu_custom_call.1} parent=1 // pred_region
      _
    $region29: #{tpu_custom_call.1} parent=1 // pred_fallthru
      _
    // Predicated region
    $region30: #{tpu_custom_call.1} parent=1 // pred_check
      _
    $region31: #{tpu_custom_call.1} parent=1 // pred_check_branch
      %97 = sbr.rel (0) target = $region33
    $region32: #{tpu_custom_call.1} parent=1 // pred_region
      %s99 = ssub.s32 1024, 1024
      %100 = vsyncadd [#allocation12], %s99
      %s101 = sshll.u32 [#allocation13], 4
      %s102 = int_to_ptr.vmem [resolvable:$true] %s101
      %107 = dma.hbm_to_vmem [thread:$0]  %s7, 1024, %s102, [#allocation12], 64, 64, 4
    $region33: #{tpu_custom_call.1} parent=1 // pred_fallthru
      _
    // Predicated region
    $region34: #{tpu_custom_call.1} parent=1 // pred_check
      _
    $region35: #{tpu_custom_call.1} parent=1 // pred_check_branch
      %109 = sbr.rel (0) target = $region37
    $region36: #{tpu_custom_call.1} parent=1 // pred_region
      _
    $region37: #{tpu_custom_call.1} parent=1 // pred_fallthru
      _
    // Predicated region
    $region38: #{tpu_custom_call.1} parent=1 // pred_check
      _
    $region39: #{tpu_custom_call.1} parent=1 // pred_check_branch
      %111 = sbr.rel (0) target = $region41
    $region40: #{tpu_custom_call.1} parent=1 // pred_region
      %s113 = ssub.s32 1024, 1024
      %114 = vsyncadd [#allocation15], %s113
      %s115 = sshll.u32 [#allocation14], 4
      %s116 = int_to_ptr.vmem [resolvable:$true] %s115
      %121 = dma.hbm_to_vmem [thread:$0]  %s9, 1024, %s116, [#allocation15], 64, 64, 4
    $region41: #{tpu_custom_call.1} parent=1 // pred_fallthru
      _
    // Predicated region
    $region42: #{tpu_custom_call.1} parent=1 // pred_check
      _
    $region43: #{tpu_custom_call.1} parent=1 // pred_check_branch
      %123 = sbr.rel (0) target = $region45
    $region44: #{tpu_custom_call.1} parent=1 // pred_region
      _
    $region45: #{tpu_custom_call.1} parent=1 // pred_fallthru
      _
    // Predicated region
    $region46: #{tpu_custom_call.1} parent=1 // pred_check
      _
    $region47: #{tpu_custom_call.1} parent=1 // pred_check_branch
      %125 = sbr.rel (0) target = $region49
    $region48: #{tpu_custom_call.1} parent=1 // pred_region
      %126 = dma.done [#allocation3], 896
    $region49: #{tpu_custom_call.1} parent=1 // pred_fallthru
      _
    // Predicated region
    $region50: #{tpu_custom_call.1} parent=1 // pred_check
      _
    $region51: #{tpu_custom_call.1} parent=1 // pred_check_branch
      %128 = sbr.rel (0) target = $region53
    $region52: #{tpu_custom_call.1} parent=1 // pred_region
      %129 = dma.done [#allocation6], 896
    $region53: #{tpu_custom_call.1} parent=1 // pred_fallthru
      _
    // Predicated region
    $region54: #{tpu_custom_call.1} parent=1 // pred_check
      _
    $region55: #{tpu_custom_call.1} parent=1 // pred_check_branch
      %131 = sbr.rel (0) target = $region57
    $region56: #{tpu_custom_call.1} parent=1 // pred_region
      %132 = dma.done [#allocation6], 896
    $region57: #{tpu_custom_call.1} parent=1 // pred_fallthru
      _
    // Predicated region
    $region58: #{tpu_custom_call.1} parent=1 // pred_check
      _
    $region59: #{tpu_custom_call.1} parent=1 // pred_check_branch
      %134 = sbr.rel (0) target = $region61
    $region60: #{tpu_custom_call.1} parent=1 // pred_region
      %135 = dma.done [#allocation9], 1024
    $region61: #{tpu_custom_call.1} parent=1 // pred_fallthru
      _
    // Predicated region
    $region62: #{tpu_custom_call.1} parent=1 // pred_check
      _
    $region63: #{tpu_custom_call.1} parent=1 // pred_check_branch
      %137 = sbr.rel (0) target = $region65
    $region64: #{tpu_custom_call.1} parent=1 // pred_region
      %138 = dma.done [#allocation9], 1024
    $region65: #{tpu_custom_call.1} parent=1 // pred_fallthru
      _
    // Predicated region
    $region66: #{tpu_custom_call.1} parent=1 // pred_check
      _
    $region67: #{tpu_custom_call.1} parent=1 // pred_check_branch
      %140 = sbr.rel (0) target = $region69
    $region68: #{tpu_custom_call.1} parent=1 // pred_region
      %141 = dma.done [#allocation12], 1024
    $region69: #{tpu_custom_call.1} parent=1 // pred_fallthru
      _
    // Predicated region
    $region70: #{tpu_custom_call.1} parent=1 // pred_check
      _
    $region71: #{tpu_custom_call.1} parent=1 // pred_check_branch
      %143 = sbr.rel (0) target = $region73
    $region72: #{tpu_custom_call.1} parent=1 // pred_region
      %144 = dma.done [#allocation12], 1024
    $region73: #{tpu_custom_call.1} parent=1 // pred_fallthru
      _
    // Predicated region
    $region74: #{tpu_custom_call.1} parent=1 // pred_check
      _
    $region75: #{tpu_custom_call.1} parent=1 // pred_check_branch
      %146 = sbr.rel (0) target = $region77
    $region76: #{tpu_custom_call.1} parent=1 // pred_region
      %147 = dma.done [#allocation15], 1024
    $region77: #{tpu_custom_call.1} parent=1 // pred_fallthru
      _
    %v149 = vld [vmem:[#allocation2] sm:$0xff]
    %v150 = vld [vmem:[#allocation2 + $0x8] sm:$0xff]
    %v151 = vld [vmem:[#allocation2 + $0x10] sm:$0xff]
    %v152 = vld [vmem:[#allocation2 + $0x18] sm:$0xff]
    %v153 = vld [vmem:[#allocation2 + $0x20] sm:$0xff]
    %v154 = vld [vmem:[#allocation2 + $0x28] sm:$0xff]
    %v155 = vld [vmem:[#allocation2 + $0x30] sm:$0x3]
    %v156 = vpack.c.bf16 %v150, %v149
    %v157 = vpack.c.bf16 %v152, %v151
    %v158 = vpack.c.bf16 %v154, %v153
    %v159 = vpack.c.bf16 %v155, %v155
    %v160 = vld [vmem:[#allocation5] sm:$0xff]
    %v161 = vld [vmem:[#allocation5 + $0x8] sm:$0xff]
    %v162 = vld [vmem:[#allocation5 + $0x10] sm:$0xff]
    %v163 = vld [vmem:[#allocation5 + $0x18] sm:$0xff]
    %v164 = vld [vmem:[#allocation5 + $0x20] sm:$0xff]
    %v165 = vld [vmem:[#allocation5 + $0x28] sm:$0xff]
    %v166 = vld [vmem:[#allocation5 + $0x30] sm:$0x3]
    %v167 = vpack.c.bf16 %v161, %v160
    %v168 = vpack.c.bf16 %v163, %v162
    %v169 = vpack.c.bf16 %v165, %v164
    %v170 = vpack.c.bf16 %v166, %v166
    %v171 = vld [vmem:[#allocation7] sm:$0xff]
    %v172 = vld [vmem:[#allocation7 + $0x8] sm:$0xff]
    %v173 = vld [vmem:[#allocation7 + $0x10] sm:$0xff]
    %v174 = vld [vmem:[#allocation7 + $0x18] sm:$0xff]
    %v175 = vld [vmem:[#allocation7 + $0x20] sm:$0xff]
    %v176 = vld [vmem:[#allocation7 + $0x28] sm:$0xff]
    %v177 = vld [vmem:[#allocation7 + $0x30] sm:$0x3]
    %v178 = vpack.c.bf16 %v172, %v171
    %v179 = vpack.c.bf16 %v174, %v173
    %v180 = vpack.c.bf16 %v176, %v175
    %v181 = vpack.c.bf16 %v177, %v177
    %v182 = vld [vmem:[#allocation8] sm:$0xf]
    %v183 = vld [vmem:[#allocation8 + $0x4] sm:$0xf]
    %v184 = vld [vmem:[#allocation8 + $0x8] sm:$0xf]
    %v185 = vld [vmem:[#allocation8 + $0xc] sm:$0xf]
    %v186 = vld [vmem:[#allocation8 + $0x10] sm:$0xf]
    %v187 = vld [vmem:[#allocation8 + $0x14] sm:$0xf]
    %v188 = vld [vmem:[#allocation8 + $0x18] sm:$0xf]
    %v189 = vld [vmem:[#allocation8 + $0x1c] sm:$0xf]
    %v190 = vld [vmem:[#allocation8 + $0x20] sm:$0xf]
    %v191 = vld [vmem:[#allocation8 + $0x24] sm:$0xf]
    %v192 = vld [vmem:[#allocation8 + $0x28] sm:$0xf]
    %v193 = vld [vmem:[#allocation8 + $0x2c] sm:$0xf]
    %v194 = vld [vmem:[#allocation8 + $0x30] sm:$0xf]
    %v195 = vld [vmem:[#allocation8 + $0x34] sm:$0xf]
    %v196 = vld [vmem:[#allocation8 + $0x38] sm:$0xf]
    %v197 = vld [vmem:[#allocation8 + $0x3c] sm:$0xf]
    %v198 = vld [vmem:[#allocation10] sm:$0xf]
    %v199 = vld [vmem:[#allocation10 + $0x4] sm:$0xf]
    %v200 = vld [vmem:[#allocation10 + $0x8] sm:$0xf]
    %v201 = vld [vmem:[#allocation10 + $0xc] sm:$0xf]
    %v202 = vld [vmem:[#allocation10 + $0x10] sm:$0xf]
    %v203 = vld [vmem:[#allocation10 + $0x14] sm:$0xf]
    %v204 = vld [vmem:[#allocation10 + $0x18] sm:$0xf]
    %v205 = vld [vmem:[#allocation10 + $0x1c] sm:$0xf]
    %v206 = vld [vmem:[#allocation10 + $0x20] sm:$0xf]
    %v207 = vld [vmem:[#allocation10 + $0x24] sm:$0xf]
    %v208 = vld [vmem:[#allocation10 + $0x28] sm:$0xf]
    %v209 = vld [vmem:[#allocation10 + $0x2c] sm:$0xf]
    %v210 = vld [vmem:[#allocation10 + $0x30] sm:$0xf]
    %v211 = vld [vmem:[#allocation10 + $0x34] sm:$0xf]
    %v212 = vld [vmem:[#allocation10 + $0x38] sm:$0xf]
    %v213 = vld [vmem:[#allocation10 + $0x3c] sm:$0xf]
    %v230 = vunpack.c.l.b16 %v198
    %v231 = vunpack.c.l.b16 %v199
    %v232 = vunpack.c.l.b16 %v200
    %v233 = vunpack.c.l.b16 %v201
    %v234 = vunpack.c.l.b16 %v202
    %v235 = vunpack.c.l.b16 %v203
    %v236 = vunpack.c.l.b16 %v204
    %v237 = vunpack.c.l.b16 %v205
    %v238 = vunpack.c.l.b16 %v206
    %v239 = vunpack.c.l.b16 %v207
    %v240 = vunpack.c.l.b16 %v208
    %v241 = vunpack.c.l.b16 %v209
    %v242 = vunpack.c.l.b16 %v210
    %v243 = vunpack.c.l.b16 %v211
    %v244 = vunpack.c.l.b16 %v212
    %v245 = vunpack.c.l.b16 %v213
    %v246 = vpack.c.b16 %v231, %v230
    %v247 = vpack.c.b16 %v233, %v232
    %v248 = vpack.c.b16 %v235, %v234
    %v249 = vpack.c.b16 %v237, %v236
    %v250 = vpack.c.b16 %v239, %v238
    %v251 = vpack.c.b16 %v241, %v240
    %v252 = vpack.c.b16 %v243, %v242
    %v253 = vpack.c.b16 %v245, %v244
    %262 = vmatprep.subr.bf16.mxu0 0
    %263 = vmatpush1.bf16.msra.mxu0 %v246
    %264 = vmatprep.subr.bf16.mxu0 0
    %265 = vmatpush1.bf16.msra.mxu0 %v247
    %266 = vmatprep.subr.bf16.mxu0 0
    %267 = vmatpush1.bf16.msra.mxu0 %v248
    %268 = vmatprep.subr.bf16.mxu0 0
    %269 = vmatpush1.bf16.msra.mxu0 %v249
    %270 = vmatprep.subr.bf16.mxu0 0
    %271 = vmatpush1.bf16.msra.mxu0 %v250
    %272 = vmatprep.subr.bf16.mxu0 0
    %273 = vmatpush1.bf16.msra.mxu0 %v251
    %274 = vmatprep.subr.bf16.mxu0 0
    %275 = vmatpush1.bf16.msra.mxu0 %v252
    %276 = vmatprep.subr.bf16.mxu0 0
    %277 = vmatpush1.bf16.msra.mxu0 %v253
    %278 = vmatprep.subr.bf16.mxu0 0
    %279 = vmatpush1.bf16.msra.mxu0 0
    %280 = vmatprep.subr.bf16.mxu0 0
    %281 = vmatpush1.bf16.msra.mxu0 0
    %282 = vmatprep.subr.bf16.mxu0 0
    %283 = vmatpush1.bf16.msra.mxu0 0
    %284 = vmatprep.subr.bf16.mxu0 0
    %285 = vmatpush1.bf16.msra.mxu0 0
    %286 = vmatprep.subr.bf16.mxu0 0
    %287 = vmatpush1.bf16.msra.mxu0 0
    %288 = vmatprep.subr.bf16.mxu0 0
    %289 = vmatpush1.bf16.msra.mxu0 0
    %290 = vmatprep.subr.bf16.mxu0 0
    %291 = vmatpush1.bf16.msra.mxu0 0
    %292 = vmatprep.subr.bf16.mxu0 0
    %293 = vmatpush1.bf16.msra.mxu0 0
    %294 = vmatprep.mubr.bf16.mxu0 0
    %295 = vmatmul.mubr.bf16.gmra.mrb[0].mxu0 %v167
    %v296 = vpop.f32.mrb[0].mxu0
    %v297 = vadd.f32 0.0, %v296
    %v298 = vpop.f32.mrb[0].mxu0
    %v299 = vpop.f32.mrb[0].mxu0
    %v300 = vadd.f32 0.0, %v299
    %v301 = vpop.f32.mrb[0].mxu0
    %302 = vmatprep.mubr.bf16.mxu0 0
    %303 = vmatmul.mubr.bf16.gmra.mrb[0].mxu0 %v168
    %v304 = vpop.f32.mrb[0].mxu0
    %v305 = vadd.f32 0.0, %v304
    %v306 = vpop.f32.mrb[0].mxu0
    %v307 = vpop.f32.mrb[0].mxu0
    %v308 = vadd.f32 0.0, %v307
    %v309 = vpop.f32.mrb[0].mxu0
    %310 = vmatprep.mubr.bf16.mxu0 0
    %311 = vmatmul.mubr.bf16.gmra.mrb[0].mxu0 %v169
    %v312 = vpop.f32.mrb[0].mxu0
    %v313 = vadd.f32 0.0, %v312
    %v314 = vpop.f32.mrb[0].mxu0
    %v315 = vpop.f32.mrb[0].mxu0
    %v316 = vadd.f32 0.0, %v315
    %v317 = vpop.f32.mrb[0].mxu0
    %318 = vmatprep.mubr.bf16.mxu0 0
    %319 = vmatmul.mubr.bf16.gmra.mrb[0].mxu0 %v170
    %v320 = vpop.f32.mrb[0].mxu0
    %v321 = vadd.f32 0.0, %v320
    %v322 = vpop.f32.mrb[0].mxu0
    %v323 = vpop.f32.mrb[0].mxu0
    %v324 = vpop.f32.mrb[0].mxu0
    %325 = vdwg.mxu0
    %v342 = vunpack.c.l.b16 %v182
    %v343 = vunpack.c.l.b16 %v183
    %v344 = vunpack.c.l.b16 %v184
    %v345 = vunpack.c.l.b16 %v185
    %v346 = vunpack.c.l.b16 %v186
    %v347 = vunpack.c.l.b16 %v187
    %v348 = vunpack.c.l.b16 %v188
    %v349 = vunpack.c.l.b16 %v189
    %v350 = vunpack.c.l.b16 %v190
    %v351 = vunpack.c.l.b16 %v191
    %v352 = vunpack.c.l.b16 %v192
    %v353 = vunpack.c.l.b16 %v193
    %v354 = vunpack.c.l.b16 %v194
    %v355 = vunpack.c.l.b16 %v195
    %v356 = vunpack.c.l.b16 %v196
    %v357 = vunpack.c.l.b16 %v197
    %v358 = vpack.c.b16 %v343, %v342
    %v359 = vpack.c.b16 %v345, %v344
    %v360 = vpack.c.b16 %v347, %v346
    %v361 = vpack.c.b16 %v349, %v348
    %v362 = vpack.c.b16 %v351, %v350
    %v363 = vpack.c.b16 %v353, %v352
    %v364 = vpack.c.b16 %v355, %v354
    %v365 = vpack.c.b16 %v357, %v356
    %374 = vmatprep.subr.bf16.mxu0 0
    %375 = vmatpush1.bf16.msra.mxu0 %v358
    %376 = vmatprep.subr.bf16.mxu0 0
    %377 = vmatpush1.bf16.msra.mxu0 %v359
    %378 = vmatprep.subr.bf16.mxu0 0
    %379 = vmatpush1.bf16.msra.mxu0 %v360
    %380 = vmatprep.subr.bf16.mxu0 0
    %381 = vmatpush1.bf16.msra.mxu0 %v361
    %382 = vmatprep.subr.bf16.mxu0 0
    %383 = vmatpush1.bf16.msra.mxu0 %v362
    %384 = vmatprep.subr.bf16.mxu0 0
    %385 = vmatpush1.bf16.msra.mxu0 %v363
    %386 = vmatprep.subr.bf16.mxu0 0
    %387 = vmatpush1.bf16.msra.mxu0 %v364
    %388 = vmatprep.subr.bf16.mxu0 0
    %389 = vmatpush1.bf16.msra.mxu0 %v365
    %390 = vmatprep.subr.bf16.mxu0 0
    %391 = vmatpush1.bf16.msra.mxu0 0
    %392 = vmatprep.subr.bf16.mxu0 0
    %393 = vmatpush1.bf16.msra.mxu0 0
    %394 = vmatprep.subr.bf16.mxu0 0
    %395 = vmatpush1.bf16.msra.mxu0 0
    %396 = vmatprep.subr.bf16.mxu0 0
    %397 = vmatpush1.bf16.msra.mxu0 0
    %398 = vmatprep.subr.bf16.mxu0 0
    %399 = vmatpush1.bf16.msra.mxu0 0
    %400 = vmatprep.subr.bf16.mxu0 0
    %401 = vmatpush1.bf16.msra.mxu0 0
    %402 = vmatprep.subr.bf16.mxu0 0
    %403 = vmatpush1.bf16.msra.mxu0 0
    %404 = vmatprep.subr.bf16.mxu0 0
    %405 = vmatpush1.bf16.msra.mxu0 0
    %406 = vmatprep.mubr.bf16.mxu0 0
    %407 = vmatmul.mubr.bf16.gmra.mrb[0].mxu0 %v156
    %v408 = vpop.f32.mrb[0].mxu0
    %v409 = vadd.f32 %v297, %v408
    %v410 = vpop.f32.mrb[0].mxu0
    %v411 = vpop.f32.mrb[0].mxu0
    %v412 = vadd.f32 %v300, %v411
    %v413 = vpop.f32.mrb[0].mxu0
    %414 = vmatprep.mubr.bf16.mxu0 0
    %415 = vmatmul.mubr.bf16.gmra.mrb[0].mxu0 %v157
    %v416 = vpop.f32.mrb[0].mxu0
    %v417 = vadd.f32 %v305, %v416
    %v418 = vpop.f32.mrb[0].mxu0
    %v419 = vpop.f32.mrb[0].mxu0
    %v420 = vadd.f32 %v308, %v419
    %v421 = vpop.f32.mrb[0].mxu0
    %422 = vmatprep.mubr.bf16.mxu0 0
    %423 = vmatmul.mubr.bf16.gmra.mrb[0].mxu0 %v158
    %v424 = vpop.f32.mrb[0].mxu0
    %v425 = vadd.f32 %v313, %v424
    %v426 = vpop.f32.mrb[0].mxu0
    %v427 = vpop.f32.mrb[0].mxu0
    %v428 = vadd.f32 %v316, %v427
    %v429 = vpop.f32.mrb[0].mxu0
    %430 = vmatprep.mubr.bf16.mxu0 0
    %431 = vmatmul.mubr.bf16.gmra.mrb[0].mxu0 %v159
    %v432 = vpop.f32.mrb[0].mxu0
    %v433 = vadd.f32 %v321, %v432
    %v434 = vpop.f32.mrb[0].mxu0
    %v435 = vpop.f32.mrb[0].mxu0
    %v436 = vpop.f32.mrb[0].mxu0
    %437 = vdwg.mxu0
    %v438 = vld [vmem:[#allocation11] sm:$0xf]
    %v439 = vld [vmem:[#allocation11 + $0x4] sm:$0xf]
    %v440 = vld [vmem:[#allocation11 + $0x8] sm:$0xf]
    %v441 = vld [vmem:[#allocation11 + $0xc] sm:$0xf]
    %v442 = vld [vmem:[#allocation11 + $0x10] sm:$0xf]
    %v443 = vld [vmem:[#allocation11 + $0x14] sm:$0xf]
    %v444 = vld [vmem:[#allocation11 + $0x18] sm:$0xf]
    %v445 = vld [vmem:[#allocation11 + $0x1c] sm:$0xf]
    %v446 = vld [vmem:[#allocation11 + $0x20] sm:$0xf]
    %v447 = vld [vmem:[#allocation11 + $0x24] sm:$0xf]
    %v448 = vld [vmem:[#allocation11 + $0x28] sm:$0xf]
    %v449 = vld [vmem:[#allocation11 + $0x2c] sm:$0xf]
    %v450 = vld [vmem:[#allocation11 + $0x30] sm:$0xf]
    %v451 = vld [vmem:[#allocation11 + $0x34] sm:$0xf]
    %v452 = vld [vmem:[#allocation11 + $0x38] sm:$0xf]
    %v453 = vld [vmem:[#allocation11 + $0x3c] sm:$0xf]
    %v470 = vunpack.c.l.b16 %v438
    %v471 = vunpack.c.l.b16 %v439
    %v472 = vunpack.c.l.b16 %v440
    %v473 = vunpack.c.l.b16 %v441
    %v474 = vunpack.c.l.b16 %v442
    %v475 = vunpack.c.l.b16 %v443
    %v476 = vunpack.c.l.b16 %v444
    %v477 = vunpack.c.l.b16 %v445
    %v478 = vunpack.c.l.b16 %v446
    %v479 = vunpack.c.l.b16 %v447
    %v480 = vunpack.c.l.b16 %v448
    %v481 = vunpack.c.l.b16 %v449
    %v482 = vunpack.c.l.b16 %v450
    %v483 = vunpack.c.l.b16 %v451
    %v484 = vunpack.c.l.b16 %v452
    %v485 = vunpack.c.l.b16 %v453
    %v486 = vpack.c.b16 %v471, %v470
    %v487 = vpack.c.b16 %v473, %v472
    %v488 = vpack.c.b16 %v475, %v474
    %v489 = vpack.c.b16 %v477, %v476
    %v490 = vpack.c.b16 %v479, %v478
    %v491 = vpack.c.b16 %v481, %v480
    %v492 = vpack.c.b16 %v483, %v482
    %v493 = vpack.c.b16 %v485, %v484
    %502 = vmatprep.subr.bf16.mxu0 0
    %503 = vmatpush1.bf16.msra.mxu0 %v486
    %504 = vmatprep.subr.bf16.mxu0 0
    %505 = vmatpush1.bf16.msra.mxu0 %v487
    %506 = vmatprep.subr.bf16.mxu0 0
    %507 = vmatpush1.bf16.msra.mxu0 %v488
    %508 = vmatprep.subr.bf16.mxu0 0
    %509 = vmatpush1.bf16.msra.mxu0 %v489
    %510 = vmatprep.subr.bf16.mxu0 0
    %511 = vmatpush1.bf16.msra.mxu0 %v490
    %512 = vmatprep.subr.bf16.mxu0 0
    %513 = vmatpush1.bf16.msra.mxu0 %v491
    %514 = vmatprep.subr.bf16.mxu0 0
    %515 = vmatpush1.bf16.msra.mxu0 %v492
    %516 = vmatprep.subr.bf16.mxu0 0
    %517 = vmatpush1.bf16.msra.mxu0 %v493
    %518 = vmatprep.subr.bf16.mxu0 0
    %519 = vmatpush1.bf16.msra.mxu0 0
    %520 = vmatprep.subr.bf16.mxu0 0
    %521 = vmatpush1.bf16.msra.mxu0 0
    %522 = vmatprep.subr.bf16.mxu0 0
    %523 = vmatpush1.bf16.msra.mxu0 0
    %524 = vmatprep.subr.bf16.mxu0 0
    %525 = vmatpush1.bf16.msra.mxu0 0
    %526 = vmatprep.subr.bf16.mxu0 0
    %527 = vmatpush1.bf16.msra.mxu0 0
    %528 = vmatprep.subr.bf16.mxu0 0
    %529 = vmatpush1.bf16.msra.mxu0 0
    %530 = vmatprep.subr.bf16.mxu0 0
    %531 = vmatpush1.bf16.msra.mxu0 0
    %532 = vmatprep.subr.bf16.mxu0 0
    %533 = vmatpush1.bf16.msra.mxu0 0
    %534 = vmatprep.mubr.bf16.mxu0 0
    %535 = vmatmul.mubr.bf16.gmra.mrb[0].mxu0 %v178
    %v536 = vpop.f32.mrb[0].mxu0
    %v537 = vadd.f32 0.0, %v536
    %v538 = vpop.f32.mrb[0].mxu0
    %v539 = vpop.f32.mrb[0].mxu0
    %v540 = vadd.f32 0.0, %v539
    %v541 = vpop.f32.mrb[0].mxu0
    %542 = vmatprep.mubr.bf16.mxu0 0
    %543 = vmatmul.mubr.bf16.gmra.mrb[0].mxu0 %v179
    %v544 = vpop.f32.mrb[0].mxu0
    %v545 = vadd.f32 0.0, %v544
    %v546 = vpop.f32.mrb[0].mxu0
    %v547 = vpop.f32.mrb[0].mxu0
    %v548 = vadd.f32 0.0, %v547
    %v549 = vpop.f32.mrb[0].mxu0
    %550 = vmatprep.mubr.bf16.mxu0 0
    %551 = vmatmul.mubr.bf16.gmra.mrb[0].mxu0 %v180
    %v552 = vpop.f32.mrb[0].mxu0
    %v553 = vadd.f32 0.0, %v552
    %v554 = vpop.f32.mrb[0].mxu0
    %v555 = vpop.f32.mrb[0].mxu0
    %v556 = vadd.f32 0.0, %v555
    %v557 = vpop.f32.mrb[0].mxu0
    %558 = vmatprep.mubr.bf16.mxu0 0
    %559 = vmatmul.mubr.bf16.gmra.mrb[0].mxu0 %v181
    %v560 = vpop.f32.mrb[0].mxu0
    %v561 = vadd.f32 0.0, %v560
    %v562 = vpop.f32.mrb[0].mxu0
    %v563 = vpop.f32.mrb[0].mxu0
    %v564 = vpop.f32.mrb[0].mxu0
    %565 = vdwg.mxu0
    %v566 = vadd.f32 %v409, %v537
    %v567 = vadd.f32 %v412, %v540
    %v568 = vadd.f32 %v417, %v545
    %v569 = vadd.f32 %v420, %v548
    %v570 = vadd.f32 %v425, %v553
    %v571 = vadd.f32 %v428, %v556
    %v572 = vadd.f32 %v433, %v561
    %v573 = vld [vmem:[%s6] sm:$0x1]
    %v575 = vlaneseq
    %v576 = vshrl.u32 %v575, 7
    %v577 = vsub.s32 0, %v576
    %v578 = vrot.slane %v573, %v577
    %v580 = vadd.f32 %v566, %v578
    %v581 = vadd.f32 %v567, %v578
    %v582 = vadd.f32 %v568, %v578
    %v583 = vadd.f32 %v569, %v578
    %v584 = vadd.f32 %v570, %v578
    %v585 = vadd.f32 %v571, %v578
    %v586 = vadd.f32 %v572, %v578
    %v587 = vxor.u32 %v580, 2147483648
    %v588 = vxor.u32 %v581, 2147483648
    %v589 = vxor.u32 %v582, 2147483648
    %v590 = vxor.u32 %v583, 2147483648
    %v591 = vxor.u32 %v584, 2147483648
    %v592 = vxor.u32 %v585, 2147483648
    %v593 = vxor.u32 %v586, 2147483648
    %v594 = vmul.f32 %v587, 1.442695
    %v595 = vpow.pop %v594
    %v596 = vmul.f32 %v588, 1.442695
    %v597 = vpow.pop %v596
    %v598 = vmul.f32 %v589, 1.442695
    %v599 = vpow.pop %v598
    %v600 = vmul.f32 %v590, 1.442695
    %v601 = vpow.pop %v600
    %v602 = vmul.f32 %v591, 1.442695
    %v603 = vpow.pop %v602
    %v604 = vmul.f32 %v592, 1.442695
    %v605 = vpow.pop %v604
    %v606 = vmul.f32 %v593, 1.442695
    %v607 = vpow.pop %v606
    %v608 = vadd.f32 %v595, 1.0
    %v609 = vadd.f32 %v597, 1.0
    %v610 = vadd.f32 %v599, 1.0
    %v611 = vadd.f32 %v601, 1.0
    %v612 = vadd.f32 %v603, 1.0
    %v613 = vadd.f32 %v605, 1.0
    %v614 = vadd.f32 %v607, 1.0
    %v615 = vrcp.pop %v608
    %v616 = vmul.f32 1.0, %v615
    %v617 = vrcp.pop %v609
    %v618 = vmul.f32 1.0, %v617
    %v619 = vrcp.pop %v610
    %v620 = vmul.f32 1.0, %v619
    %v621 = vrcp.pop %v611
    %v622 = vmul.f32 1.0, %v621
    %v623 = vrcp.pop %v612
    %v624 = vmul.f32 1.0, %v623
    %v625 = vrcp.pop %v613
    %v626 = vmul.f32 1.0, %v625
    %v627 = vrcp.pop %v614
    %v628 = vmul.f32 1.0, %v627
    %v629 = vmul.f32 %v580, %v616
    %v630 = vmul.f32 %v581, %v618
    %v631 = vmul.f32 %v582, %v620
    %v632 = vmul.f32 %v583, %v622
    %v633 = vmul.f32 %v584, %v624
    %v634 = vmul.f32 %v585, %v626
    %v635 = vmul.f32 %v586, %v628
    %v636 = vld [vmem:[#allocation13] sm:$0xf]
    %v637 = vld [vmem:[#allocation13 + $0x4] sm:$0xf]
    %v638 = vld [vmem:[#allocation13 + $0x8] sm:$0xf]
    %v639 = vld [vmem:[#allocation13 + $0xc] sm:$0xf]
    %v640 = vld [vmem:[#allocation13 + $0x10] sm:$0xf]
    %v641 = vld [vmem:[#allocation13 + $0x14] sm:$0xf]
    %v642 = vld [vmem:[#allocation13 + $0x18] sm:$0xf]
    %v643 = vld [vmem:[#allocation13 + $0x1c] sm:$0xf]
    %v644 = vld [vmem:[#allocation13 + $0x20] sm:$0xf]
    %v645 = vld [vmem:[#allocation13 + $0x24] sm:$0xf]
    %v646 = vld [vmem:[#allocation13 + $0x28] sm:$0xf]
    %v647 = vld [vmem:[#allocation13 + $0x2c] sm:$0xf]
    %v648 = vld [vmem:[#allocation13 + $0x30] sm:$0xf]
    %v649 = vld [vmem:[#allocation13 + $0x34] sm:$0xf]
    %v650 = vld [vmem:[#allocation13 + $0x38] sm:$0xf]
    %v651 = vld [vmem:[#allocation13 + $0x3c] sm:$0xf]
    %v652 = vld [vmem:[%s8] sm:$0x1]
    %v653 = vpack.c.bf16 %v630, %v629
    %v654 = vpack.c.bf16 %v632, %v631
    %v655 = vpack.c.bf16 %v634, %v633
    %v656 = vpack.c.bf16 %v635, %v635
    %v658 = vlaneseq
    %v659 = vshrl.u32 %v658, 7
    %v660 = vsub.s32 0, %v659
    %v661 = vrot.slane %v652, %v660
    %v679 = vunpack.c.l.b16 %v636
    %v680 = vunpack.c.l.b16 %v637
    %v681 = vunpack.c.l.b16 %v638
    %v682 = vunpack.c.l.b16 %v639
    %v683 = vunpack.c.l.b16 %v640
    %v684 = vunpack.c.l.b16 %v641
    %v685 = vunpack.c.l.b16 %v642
    %v686 = vunpack.c.l.b16 %v643
    %v687 = vunpack.c.l.b16 %v644
    %v688 = vunpack.c.l.b16 %v645
    %v689 = vunpack.c.l.b16 %v646
    %v690 = vunpack.c.l.b16 %v647
    %v691 = vunpack.c.l.b16 %v648
    %v692 = vunpack.c.l.b16 %v649
    %v693 = vunpack.c.l.b16 %v650
    %v694 = vunpack.c.l.b16 %v651
    %v695 = vpack.c.b16 %v680, %v679
    %v696 = vpack.c.b16 %v682, %v681
    %v697 = vpack.c.b16 %v684, %v683
    %v698 = vpack.c.b16 %v686, %v685
    %v699 = vpack.c.b16 %v688, %v687
    %v700 = vpack.c.b16 %v690, %v689
    %v701 = vpack.c.b16 %v692, %v691
    %v702 = vpack.c.b16 %v694, %v693
    %711 = vmatprep.subr.bf16.mxu0 0
    %712 = vmatpush1.bf16.msra.mxu0 %v695
    %713 = vmatprep.subr.bf16.mxu0 0
    %714 = vmatpush1.bf16.msra.mxu0 %v696
    %715 = vmatprep.subr.bf16.mxu0 0
    %716 = vmatpush1.bf16.msra.mxu0 %v697
    %717 = vmatprep.subr.bf16.mxu0 0
    %718 = vmatpush1.bf16.msra.mxu0 %v698
    %719 = vmatprep.subr.bf16.mxu0 0
    %720 = vmatpush1.bf16.msra.mxu0 %v699
    %721 = vmatprep.subr.bf16.mxu0 0
    %722 = vmatpush1.bf16.msra.mxu0 %v700
    %723 = vmatprep.subr.bf16.mxu0 0
    %724 = vmatpush1.bf16.msra.mxu0 %v701
    %725 = vmatprep.subr.bf16.mxu0 0
    %726 = vmatpush1.bf16.msra.mxu0 %v702
    %727 = vmatprep.subr.bf16.mxu0 0
    %728 = vmatpush1.bf16.msra.mxu0 0
    %729 = vmatprep.subr.bf16.mxu0 0
    %730 = vmatpush1.bf16.msra.mxu0 0
    %731 = vmatprep.subr.bf16.mxu0 0
    %732 = vmatpush1.bf16.msra.mxu0 0
    %733 = vmatprep.subr.bf16.mxu0 0
    %734 = vmatpush1.bf16.msra.mxu0 0
    %735 = vmatprep.subr.bf16.mxu0 0
    %736 = vmatpush1.bf16.msra.mxu0 0
    %737 = vmatprep.subr.bf16.mxu0 0
    %738 = vmatpush1.bf16.msra.mxu0 0
    %739 = vmatprep.subr.bf16.mxu0 0
    %740 = vmatpush1.bf16.msra.mxu0 0
    %741 = vmatprep.subr.bf16.mxu0 0
    %742 = vmatpush1.bf16.msra.mxu0 0
    %743 = vmatprep.mubr.bf16.mxu0 0
    %744 = vmatmul.mubr.bf16.gmra.mrb[0].mxu0 %v653
    %v745 = vpop.f32.mrb[0].mxu0
    %v746 = vadd.f32 %v661, %v745
    %v747 = vpop.f32.mrb[0].mxu0
    %v748 = vpop.f32.mrb[0].mxu0
    %v749 = vadd.f32 %v661, %v748
    %v750 = vpop.f32.mrb[0].mxu0
    %751 = vmatprep.mubr.bf16.mxu0 0
    %752 = vmatmul.mubr.bf16.gmra.mrb[0].mxu0 %v654
    %v753 = vpop.f32.mrb[0].mxu0
    %v754 = vadd.f32 %v661, %v753
    %v755 = vpop.f32.mrb[0].mxu0
    %v756 = vpop.f32.mrb[0].mxu0
    %v757 = vadd.f32 %v661, %v756
    %v758 = vpop.f32.mrb[0].mxu0
    %759 = vmatprep.mubr.bf16.mxu0 0
    %760 = vmatmul.mubr.bf16.gmra.mrb[0].mxu0 %v655
    %v761 = vpop.f32.mrb[0].mxu0
    %v762 = vadd.f32 %v661, %v761
    %v763 = vpop.f32.mrb[0].mxu0
    %v764 = vpop.f32.mrb[0].mxu0
    %v765 = vadd.f32 %v661, %v764
    %v766 = vpop.f32.mrb[0].mxu0
    %767 = vmatprep.mubr.bf16.mxu0 0
    %768 = vmatmul.mubr.bf16.gmra.mrb[0].mxu0 %v656
    %v769 = vpop.f32.mrb[0].mxu0
    %v770 = vadd.f32 %v661, %v769
    %v771 = vpop.f32.mrb[0].mxu0
    %v772 = vpop.f32.mrb[0].mxu0
    %v773 = vpop.f32.mrb[0].mxu0
    %774 = vdwg.mxu0
    %v775 = vxor.u32 %v746, 2147483648
    %v776 = vxor.u32 %v749, 2147483648
    %v777 = vxor.u32 %v754, 2147483648
    %v778 = vxor.u32 %v757, 2147483648
    %v779 = vxor.u32 %v762, 2147483648
    %v780 = vxor.u32 %v765, 2147483648
    %v781 = vxor.u32 %v770, 2147483648
    %v782 = vmul.f32 %v775, 1.442695
    %v783 = vpow.pop %v782
    %v784 = vmul.f32 %v776, 1.442695
    %v785 = vpow.pop %v784
    %v786 = vmul.f32 %v777, 1.442695
    %v787 = vpow.pop %v786
    %v788 = vmul.f32 %v778, 1.442695
    %v789 = vpow.pop %v788
    %v790 = vmul.f32 %v779, 1.442695
    %v791 = vpow.pop %v790
    %v792 = vmul.f32 %v780, 1.442695
    %v793 = vpow.pop %v792
    %v794 = vmul.f32 %v781, 1.442695
    %v795 = vpow.pop %v794
    %v796 = vadd.f32 %v783, 1.0
    %v797 = vadd.f32 %v785, 1.0
    %v798 = vadd.f32 %v787, 1.0
    %v799 = vadd.f32 %v789, 1.0
    %v800 = vadd.f32 %v791, 1.0
    %v801 = vadd.f32 %v793, 1.0
    %v802 = vadd.f32 %v795, 1.0
    %v803 = vrcp.pop %v796
    %v804 = vmul.f32 1.0, %v803
    %v805 = vrcp.pop %v797
    %v806 = vmul.f32 1.0, %v805
    %v807 = vrcp.pop %v798
    %v808 = vmul.f32 1.0, %v807
    %v809 = vrcp.pop %v799
    %v810 = vmul.f32 1.0, %v809
    %v811 = vrcp.pop %v800
    %v812 = vmul.f32 1.0, %v811
    %v813 = vrcp.pop %v801
    %v814 = vmul.f32 1.0, %v813
    %v815 = vrcp.pop %v802
    %v816 = vmul.f32 1.0, %v815
    %v817 = vmul.f32 %v746, %v804
    %v818 = vmul.f32 %v749, %v806
    %v819 = vmul.f32 %v754, %v808
    %v820 = vmul.f32 %v757, %v810
    %v821 = vmul.f32 %v762, %v812
    %v822 = vmul.f32 %v765, %v814
    %v823 = vmul.f32 %v770, %v816
    %v824 = vld [vmem:[#allocation14] sm:$0xf]
    %v825 = vld [vmem:[#allocation14 + $0x4] sm:$0xf]
    %v826 = vld [vmem:[#allocation14 + $0x8] sm:$0xf]
    %v827 = vld [vmem:[#allocation14 + $0xc] sm:$0xf]
    %v828 = vld [vmem:[#allocation14 + $0x10] sm:$0xf]
    %v829 = vld [vmem:[#allocation14 + $0x14] sm:$0xf]
    %v830 = vld [vmem:[#allocation14 + $0x18] sm:$0xf]
    %v831 = vld [vmem:[#allocation14 + $0x1c] sm:$0xf]
    %v832 = vld [vmem:[#allocation14 + $0x20] sm:$0xf]
    %v833 = vld [vmem:[#allocation14 + $0x24] sm:$0xf]
    %v834 = vld [vmem:[#allocation14 + $0x28] sm:$0xf]
    %v835 = vld [vmem:[#allocation14 + $0x2c] sm:$0xf]
    %v836 = vld [vmem:[#allocation14 + $0x30] sm:$0xf]
    %v837 = vld [vmem:[#allocation14 + $0x34] sm:$0xf]
    %v838 = vld [vmem:[#allocation14 + $0x38] sm:$0xf]
    %v839 = vld [vmem:[#allocation14 + $0x3c] sm:$0xf]
    %v840 = vld [vmem:[%s10] sm:$0x1]
    %v841 = vpack.c.bf16 %v818, %v817
    %v842 = vpack.c.bf16 %v820, %v819
    %v843 = vpack.c.bf16 %v822, %v821
    %v844 = vpack.c.bf16 %v823, %v823
    %v846 = vlaneseq
    %v847 = vshrl.u32 %v846, 7
    %v848 = vsub.s32 0, %v847
    %v849 = vrot.slane %v840, %v848
    %v867 = vunpack.c.l.b16 %v824
    %v868 = vunpack.c.l.b16 %v825
    %v869 = vunpack.c.l.b16 %v826
    %v870 = vunpack.c.l.b16 %v827
    %v871 = vunpack.c.l.b16 %v828
    %v872 = vunpack.c.l.b16 %v829
    %v873 = vunpack.c.l.b16 %v830
    %v874 = vunpack.c.l.b16 %v831
    %v875 = vunpack.c.l.b16 %v832
    %v876 = vunpack.c.l.b16 %v833
    %v877 = vunpack.c.l.b16 %v834
    %v878 = vunpack.c.l.b16 %v835
    %v879 = vunpack.c.l.b16 %v836
    %v880 = vunpack.c.l.b16 %v837
    %v881 = vunpack.c.l.b16 %v838
    %v882 = vunpack.c.l.b16 %v839
    %v883 = vpack.c.b16 %v868, %v867
    %v884 = vpack.c.b16 %v870, %v869
    %v885 = vpack.c.b16 %v872, %v871
    %v886 = vpack.c.b16 %v874, %v873
    %v887 = vpack.c.b16 %v876, %v875
    %v888 = vpack.c.b16 %v878, %v877
    %v889 = vpack.c.b16 %v880, %v879
    %v890 = vpack.c.b16 %v882, %v881
    %899 = vmatprep.subr.bf16.mxu0 0
    %900 = vmatpush1.bf16.msra.mxu0 %v883
    %901 = vmatprep.subr.bf16.mxu0 0
    %902 = vmatpush1.bf16.msra.mxu0 %v884
    %903 = vmatprep.subr.bf16.mxu0 0
    %904 = vmatpush1.bf16.msra.mxu0 %v885
    %905 = vmatprep.subr.bf16.mxu0 0
    %906 = vmatpush1.bf16.msra.mxu0 %v886
    %907 = vmatprep.subr.bf16.mxu0 0
    %908 = vmatpush1.bf16.msra.mxu0 %v887
    %909 = vmatprep.subr.bf16.mxu0 0
    %910 = vmatpush1.bf16.msra.mxu0 %v888
    %911 = vmatprep.subr.bf16.mxu0 0
    %912 = vmatpush1.bf16.msra.mxu0 %v889
    %913 = vmatprep.subr.bf16.mxu0 0
    %914 = vmatpush1.bf16.msra.mxu0 %v890
    %915 = vmatprep.subr.bf16.mxu0 0
    %916 = vmatpush1.bf16.msra.mxu0 0
    %917 = vmatprep.subr.bf16.mxu0 0
    %918 = vmatpush1.bf16.msra.mxu0 0
    %919 = vmatprep.subr.bf16.mxu0 0
    %920 = vmatpush1.bf16.msra.mxu0 0
    %921 = vmatprep.subr.bf16.mxu0 0
    %922 = vmatpush1.bf16.msra.mxu0 0
    %923 = vmatprep.subr.bf16.mxu0 0
    %924 = vmatpush1.bf16.msra.mxu0 0
    %925 = vmatprep.subr.bf16.mxu0 0
    %926 = vmatpush1.bf16.msra.mxu0 0
    %927 = vmatprep.subr.bf16.mxu0 0
    %928 = vmatpush1.bf16.msra.mxu0 0
    %929 = vmatprep.subr.bf16.mxu0 0
    %930 = vmatpush1.bf16.msra.mxu0 0
    %931 = vmatprep.mubr.bf16.mxu0 0
    %932 = vmatmul.mubr.bf16.gmra.mrb[0].mxu0 %v841
    %v933 = vpop.f32.mrb[0].mxu0
    %v934 = vadd.f32 %v849, %v933
    %v935 = vpop.f32.mrb[0].mxu0
    %v936 = vpop.f32.mrb[0].mxu0
    %v937 = vadd.f32 %v849, %v936
    %v938 = vpop.f32.mrb[0].mxu0
    %939 = vmatprep.mubr.bf16.mxu0 0
    %940 = vmatmul.mubr.bf16.gmra.mrb[0].mxu0 %v842
    %v941 = vpop.f32.mrb[0].mxu0
    %v942 = vadd.f32 %v849, %v941
    %v943 = vpop.f32.mrb[0].mxu0
    %v944 = vpop.f32.mrb[0].mxu0
    %v945 = vadd.f32 %v849, %v944
    %v946 = vpop.f32.mrb[0].mxu0
    %947 = vmatprep.mubr.bf16.mxu0 0
    %948 = vmatmul.mubr.bf16.gmra.mrb[0].mxu0 %v843
    %v949 = vpop.f32.mrb[0].mxu0
    %v950 = vadd.f32 %v849, %v949
    %v951 = vpop.f32.mrb[0].mxu0
    %v952 = vpop.f32.mrb[0].mxu0
    %v953 = vadd.f32 %v849, %v952
    %v954 = vpop.f32.mrb[0].mxu0
    %955 = vmatprep.mubr.bf16.mxu0 0
    %956 = vmatmul.mubr.bf16.gmra.mrb[0].mxu0 %v844
    %v957 = vpop.f32.mrb[0].mxu0
    %v958 = vadd.f32 %v849, %v957
    %v959 = vpop.f32.mrb[0].mxu0
    %v960 = vpop.f32.mrb[0].mxu0
    %v961 = vpop.f32.mrb[0].mxu0
    %962 = vdwg.mxu0
    %963 = vst [vmem:[#allocation16] sm:$0xff] %v934
    %964 = vst [vmem:[#allocation16 + $0x8] sm:$0xff] %v937
    %965 = vst [vmem:[#allocation16 + $0x10] sm:$0xff] %v942
    %966 = vst [vmem:[#allocation16 + $0x18] sm:$0xff] %v945
    %967 = vst [vmem:[#allocation16 + $0x20] sm:$0xff] %v950
    %968 = vst [vmem:[#allocation16 + $0x28] sm:$0xff] %v953
    %969 = vst [vmem:[#allocation16 + $0x30] sm:$0x3] %v958
    // Predicated region
    $region78: #{tpu_custom_call.1} parent=1 // pred_check
      _
    $region79: #{tpu_custom_call.1} parent=1 // pred_check_branch
      %971 = sbr.rel (0) target = $region81
    $region80: #{tpu_custom_call.1} parent=1 // pred_region
      %s973 = ssub.s32 896, 896
      %974 = vsyncadd [#allocation4], %s973
      %s975 = sshll.u32 [#allocation16], 4
      %s976 = int_to_ptr.vmem [resolvable:$true] %s975
      %981 = dma.vmem_to_hbm [thread:$0]  %s976, 896, %s11, [#allocation4], 128, 128, 8
    $region81: #{tpu_custom_call.1} parent=1 // pred_fallthru
      _
    // Predicated region
    $region82: #{tpu_custom_call.1} parent=1 // pred_check
      _
    $region83: #{tpu_custom_call.1} parent=1 // pred_check_branch
      %983 = sbr.rel (0) target = $region85
    $region84: #{tpu_custom_call.1} parent=1 // pred_region
      %984 = dma.done [#allocation4], 896
    $region85: #{tpu_custom_call.1} parent=1 // pred_fallthru
      _
    %985 = vsyncpa [#allocation3], 1
    %986 = vsyncpa [#allocation6], 1
    %987 = vsyncpa [#allocation9], 1
    %988 = vsyncpa [#allocation12], 1
    %989 = vsyncpa [#allocation15], 1
    %990 = vsyncpa [#allocation4], 1

</llo_original>
